<compile_context>
chip_gen: v7x
topology: tpu7x:2x2x1
jax: 0.10.0
libtpu: 0.0.40
codegen_flags: <defaults>
</compile_context>

<pallas_src>
import functools
import itertools

import numpy as np
import jax
import jax.numpy as jnp
from jax.experimental import pallas as pl
from jax.experimental.pallas import tpu as pltpu


def _round_up(x, m):
    return ((x + m - 1) // m) * m


def _cdiv(a, b):
    return -(-a // b)


def _vmem_capacity_bytes():
    try:
        return int(pltpu.get_tpu_info().vmem_capacity_bytes)
    except Exception:
        return 64 << 20  # v7x has the smallest per-TC VMEM; be conservative.


# ----------------------------------------------------------------------------
# Pallas kernel: one row-tile of the DETR matching cost matrix
# ----------------------------------------------------------------------------
def _matcher_cost_kernel(logits_ref, onehot_ref, obox_ref, tboxt_ref, cost_ref,
                         *, w_class, w_bbox, w_giou):
    # ---- class cost: softmax + gather fused into one MXU matmul --------------
    logits = logits_ref[...].astype(jnp.float32)                       # [TM, C]
    m = jnp.max(logits, axis=-1, keepdims=True)
    e = jnp.exp(logits - m)                                            # [TM, C]
    inv_rowsum = pl.reciprocal(jnp.sum(e, axis=-1, keepdims=True),
                               approx=True)                            # [TM, 1]
    # Fold the softmax normalization, the negation and the class weight into the
    # matmul LHS (a C-domain op) so nothing extra touches the [TM, T_pad] domain.
    e_scaled = e * ((-w_class) * inv_rowsum)                           # [TM, C]
    cost_class_w = jnp.dot(e_scaled.astype(jnp.bfloat16), onehot_ref[...],
                           preferred_element_type=jnp.float32)         # [TM, T_pad]

    ob = obox_ref[...].astype(jnp.float32)                             # [TM, 4]
    tb = tboxt_ref[...].astype(jnp.float32)                            # [4, T_pad]

    # ---- L1 bbox cost, weight folded into the small domain -------------------
    if w_bbox >= 0.0:
        ob_l1, tb_l1 = ob * w_bbox, tb * w_bbox
    else:  # negative weight: |w*(a-b)| != w*|a-b|; keep the post-mul (rare case)
        ob_l1, tb_l1 = ob, tb
    cost_bbox_w = (jnp.abs(ob_l1[:, 0:1] - tb_l1[0:1, :])
                   + jnp.abs(ob_l1[:, 1:2] - tb_l1[1:2, :])
                   + jnp.abs(ob_l1[:, 2:3] - tb_l1[2:3, :])
                   + jnp.abs(ob_l1[:, 3:4] - tb_l1[3:4, :]))           # [TM, T_pad]
    if w_bbox < 0.0:
        cost_bbox_w = w_bbox * cost_bbox_w

    # ---- cxcywh -> xyxy on the small domain -----------------------------------
    ocx, ocy, ow, oh = ob[:, 0:1], ob[:, 1:2], ob[:, 2:3], ob[:, 3:4]  # [TM, 1]
    tcx, tcy, tw, th = tb[0:1, :], tb[1:2, :], tb[2:3, :], tb[3:4, :]  # [1, T_pad]
    ox0, oy0 = ocx - 0.5 * ow, ocy - 0.5 * oh
    ox1, oy1 = ocx + 0.5 * ow, ocy + 0.5 * oh
    tx0, ty0 = tcx - 0.5 * tw, tcy - 0.5 * th
    tx1, ty1 = tcx + 0.5 * tw, tcy + 0.5 * th

    area1 = (ox1 - ox0) * (oy1 - oy0)                                  # [TM, 1]
    area2 = (tx1 - tx0) * (ty1 - ty0)                                  # [1, T_pad]

    # ---- pairwise IoU (divide -> EUP approx reciprocal) -----------------------
    iw = jnp.maximum(jnp.minimum(ox1, tx1) - jnp.maximum(ox0, tx0), 0.0)
    ih = jnp.maximum(jnp.minimum(oy1, ty1) - jnp.maximum(oy0, ty0), 0.0)
    inter = iw * ih                                                    # [TM, T_pad]
    union = (area1 + area2) - inter
    # TODO(synk): if degenerate (zero w/h) boxes are possible, clamp union/earea
    # with a tiny eps before the reciprocal (torch divides exactly -> inf/nan too).
    iou = inter * pl.reciprocal(union, approx=True)

    # Enclosing box: width/height are >= 0 for valid (w,h >= 0) boxes, so the
    # reference clamp is a mathematical no-op and is elided.
    ew = jnp.maximum(ox1, tx1) - jnp.minimum(ox0, tx0)
    eh = jnp.maximum(oy1, ty1) - jnp.minimum(oy0, ty0)
    earea = ew * eh
    # giou = iou - (earea - union)/earea  ==  iou - 1 + union/earea
    neg_giou = (1.0 - iou) - union * pl.reciprocal(earea, approx=True)

    cost_ref[...] = (cost_bbox_w + cost_class_w
                     + w_giou * neg_giou).astype(cost_ref.dtype)


# ----------------------------------------------------------------------------
# Tile sizing: per-generation VMEM budget + ~8 (even) grid steps
# ----------------------------------------------------------------------------
def _choose_row_tile(n_rows, per_row_bytes, resident_bytes, vmem_cap):
    budget = int(0.45 * vmem_cap)
    tm_max = max(8, ((budget - 2 * resident_bytes) // (2 * per_row_bytes)) // 8 * 8)

    target_steps = 8  # keeps the DMA/compute pipeline full, amortizes step overhead
    tm = _round_up(max(_cdiv(n_rows, target_steps), 1), 8)
    tm = max(8, min(tm, tm_max, _round_up(n_rows, 8)))

    steps = _cdiv(n_rows, tm)
    # v7x megacore: prefer an even number of (roughly equal) grid steps.
    if steps > 1 and steps % 2 == 1:
        tm_alt = max(8, min(_round_up(_cdiv(n_rows, steps + 1), 8), tm_max))
        if _cdiv(n_rows, tm_alt) % 2 == 0:
            tm = tm_alt
    return tm


# ----------------------------------------------------------------------------
# Wrapper: lane-dense target padding, row tiling, pallas_call
# ----------------------------------------------------------------------------
def matcher_cost_matrix(logits_flat, out_bbox_flat, tgt_ids, tgt_bbox,
                        *, cost_class=1.0, cost_bbox=1.0, cost_giou=1.0):
    """Compute the [N, T] matching cost matrix with a Pallas TPU kernel.

    logits_flat   : [N, C] float  (N = bs * num_queries)
    out_bbox_flat : [N, 4] float  (cxcywh)
    tgt_ids       : [T]    int    (concatenated target class labels)
    tgt_bbox      : [T, 4] float  (cxcywh)
    """
    N, C = logits_flat.shape
    T = int(tgt_bbox.shape[0])
    T_pad = _round_up(max(T, 1), 128)

    # One-hot built once here (tiny) instead of per grid step in-kernel.
    # Padded ids are -1 -> match no class -> class cost 0 in padded columns.
    ids_p = jnp.full((T_pad,), -1, jnp.int32).at[:T].set(tgt_ids.astype(jnp.int32))
    onehot = (jnp.arange(C, dtype=jnp.int32)[:, None]
              == ids_p[None, :]).astype(jnp.bfloat16)                   # [C, T_pad]

    # Target boxes transposed so the target axis is lane-dense; padded columns hold
    # a non-degenerate dummy box so IoU/GIoU stay finite (sliced off anyway).
    tbox_p = jnp.full((T_pad, 4), 0.5, jnp.float32).at[:T, :].set(
        tgt_bbox.astype(jnp.float32))
    tbox_t = tbox_p.T                                                    # [4, T_pad]

    obox = out_bbox_flat.astype(jnp.float32)                             # [N, 4]

    # VMEM budgeting (per generation) and tile choice.
    vmem_cap = _vmem_capacity_bytes()
    logit_bytes = jnp.dtype(logits_flat.dtype).itemsize
    per_row_bytes = C * logit_bytes + 4 * 4 + T_pad * 4                  # logits+box+out
    resident_bytes = C * T_pad * 2 + 4 * T_pad * 4                       # onehot+tbox_t
    TM = _choose_row_tile(N, per_row_bytes, resident_bytes, vmem_cap)

    vmem_limit = 2 * resident_bytes + 2 * TM * per_row_bytes + (2 << 20)
    vmem_limit = int(max(8 << 20, min(vmem_limit, int(0.9 * vmem_cap))))

    kernel = functools.partial(
        _matcher_cost_kernel,
        w_class=float(cost_class), w_bbox=float(cost_bbox), w_giou=float(cost_giou))

    grid = (_cdiv(N, TM),)
    cost = pl.pallas_call(
        kernel,
        out_shape=jax.ShapeDtypeStruct((N, T_pad), jnp.float32),
        grid=grid,
        in_specs=[
            pl.BlockSpec((TM, C), lambda i: (i, 0)),      # logits: row-tiled, unpadded C
            pl.BlockSpec((C, T_pad), lambda i: (0, 0)),   # class one-hot: resident
            pl.BlockSpec((TM, 4), lambda i: (i, 0)),      # predicted boxes: row-tiled
            pl.BlockSpec((4, T_pad), lambda i: (0, 0)),   # target boxes^T: resident
        ],
        out_specs=pl.BlockSpec((TM, T_pad), lambda i: (i, 0)),
        compiler_params=pltpu.CompilerParams(
            dimension_semantics=("parallel",),            # row tiles shard across TCs
            vmem_limit_bytes=vmem_limit),
    )(logits_flat, onehot, obox, tbox_t)

    return cost[:, :T]


# ----------------------------------------------------------------------------
# Host-side assignment (no Pallas equivalent for the Hungarian algorithm)
# ----------------------------------------------------------------------------
def _linear_sum_assignment(cost):
    # TODO(synk): linear_sum_assignment (Hungarian algorithm) is sequential /
    # data-dependent and has no clean Pallas equivalent; it runs on host.
    try:
        from scipy.optimize import linear_sum_assignment as lsa
        return lsa(cost)
    except Exception:
        # Exact brute force for small problems only (fallback if scipy is missing).
        n_rows, n_cols = cost.shape
        if n_cols == 0:
            return np.zeros(0, np.int64), np.zeros(0, np.int64)
        if n_rows > 10 or n_cols > 8:
            raise RuntimeError("scipy unavailable and problem too large for brute force")
        best, best_rows = None, None
        for rows in itertools.permutations(range(n_rows), n_cols):
            total = sum(cost[r, c] for c, r in enumerate(rows))
            if best is None or total < best:
                best, best_rows = total, rows
        pairs = sorted(zip(best_rows, range(n_cols)))
        ri = np.array([p[0] for p in pairs], dtype=np.int64)
        ci = np.array([p[1] for p in pairs], dtype=np.int64)
        return ri, ci


def hungarian_matcher(outputs, targets, *, cost_class=1.0, cost_bbox=1.0, cost_giou=1.0):
    """JAX/Pallas port of HungarianMatcher.forward."""
    logits = outputs["logits"]          # [bs, num_queries, num_classes]
    pred_boxes = outputs["pred_boxes"]  # [bs, num_queries, 4]
    bs, num_queries, num_classes = logits.shape

    logits_flat = logits.reshape(bs * num_queries, num_classes)
    out_bbox_flat = pred_boxes.reshape(bs * num_queries, 4)
    tgt_ids = jnp.concatenate([t["class_labels"] for t in targets]).astype(jnp.int32)
    tgt_bbox = jnp.concatenate([t["boxes"] for t in targets], axis=0)

    C = matcher_cost_matrix(logits_flat, out_bbox_flat, tgt_ids, tgt_bbox,
                            cost_class=cost_class, cost_bbox=cost_bbox,
                            cost_giou=cost_giou)
    C = jax.block_until_ready(C)
    C = np.asarray(C).reshape(bs, num_queries, -1)

    sizes = [int(t["boxes"].shape[0]) for t in targets]
    indices = []
    offset = 0
    for b, sz in enumerate(sizes):
        sub = C[b, :, offset:offset + sz]
        i, j = _linear_sum_assignment(sub)
        indices.append((np.asarray(i, dtype=np.int64), np.asarray(j, dtype=np.int64)))
        offset += sz
    return indices, C


# ----------------------------------------------------------------------------
# Pure-numpy reference for a correctness check of the kernel
# ----------------------------------------------------------------------------
def _ref_cost_matrix(logits_flat, out_bbox, tgt_ids, tgt_bbox, wc, wb, wg):
    logits_flat = np.asarray(logits_flat, np.float32)
    out_bbox = np.asarray(out_bbox, np.float32)
    tgt_bbox = np.asarray(tgt_bbox, np.float32)
    tgt_ids = np.asarray(tgt_ids, np.int64)

    e = np.exp(logits_flat - logits_flat.max(-1, keepdims=True))
    prob = e / e.sum(-1, keepdims=True)
    cost_class = -prob[:, tgt_ids]
    cost_bbox = np.abs(out_bbox[:, None, :] - tgt_bbox[None, :, :]).sum(-1)

    def to_xyxy(b):
        cx, cy, w, h = b[:, 0], b[:, 1], b[:, 2], b[:, 3]
        return np.stack([cx - 0.5 * w, cy - 0.5 * h, cx + 0.5 * w, cy + 0.5 * h], -1)

    b1, b2 = to_xyxy(out_bbox), to_xyxy(tgt_bbox)
    a1 = (b1[:, 2] - b1[:, 0]) * (b1[:, 3] - b1[:, 1])
    a2 = (b2[:, 2] - b2[:, 0]) * (b2[:, 3] - b2[:, 1])
    lt = np.maximum(b1[:, None, :2], b2[None, :, :2])
    rb = np.minimum(b1[:, None, 2:], b2[None, :, 2:])
    wh = np.clip(rb - lt, 0, None)
    inter = wh[..., 0] * wh[..., 1]
    union = a1[:, None] + a2[None, :] - inter
    iou = inter / union
    lt2 = np.minimum(b1[:, None, :2], b2[None, :, :2])
    rb2 = np.maximum(b1[:, None, 2:], b2[None, :, 2:])
    wh2 = np.clip(rb2 - lt2, 0, None)
    area = wh2[..., 0] * wh2[..., 1]
    giou = iou - (area - union) / area
    return wb * cost_bbox + wc * cost_class + wg * (-giou)


# ----------------------------------------------------------------------------
if __name__ == "__main__":
    key = jax.random.PRNGKey(0)
    bs, num_queries, num_classes = 2, 8, 32
    sizes = [3, 2]  # number of ground-truth boxes per batch element

    k1, k2, k3, k4, k5, k6 = jax.random.split(key, 6)

    logits = jax.random.normal(k1, (bs, num_queries, num_classes), jnp.float32)
    # predicted boxes in cxcywh with positive w/h
    pred_cxy = jax.random.uniform(k2, (bs, num_queries, 2), minval=0.2, maxval=0.8)
    pred_wh = jax.random.uniform(k3, (bs, num_queries, 2), minval=0.05, maxval=0.3)
    pred_boxes = jnp.concatenate([pred_cxy, pred_wh], axis=-1).astype(jnp.float32)

    targets = []
    tk = [k4, k5]
    for b, sz in enumerate(sizes):
        ka, kb, kc = jax.random.split(tk[b], 3)
        t_cxy = jax.random.uniform(ka, (sz, 2), minval=0.2, maxval=0.8)
        t_wh = jax.random.uniform(kb, (sz, 2), minval=0.05, maxval=0.3)
        boxes = jnp.concatenate([t_cxy, t_wh], axis=-1).astype(jnp.float32)
        labels = jax.random.randint(kc, (sz,), 0, num_classes, dtype=jnp.int32)
        targets.append({"class_labels": labels, "boxes": boxes})

    outputs = {"logits": logits, "pred_boxes": pred_boxes}

    indices, C = hungarian_matcher(outputs, targets,
                                   cost_class=1.0, cost_bbox=1.0, cost_giou=1.0)

    # correctness check of the Pallas-computed cost matrix against the numpy
    # reference (loose tolerance: bf16 class-cost matmul + EUP approx reciprocals)
    tgt_ids_np = np.concatenate([np.asarray(t["class_labels"]) for t in targets])
    tgt_bbox_np = np.concatenate([np.asarray(t["boxes"]) for t in targets], 0)
    C_ref = _ref_cost_matrix(
        np.asarray(logits).reshape(bs * num_queries, num_classes),
        np.asarray(pred_boxes).reshape(bs * num_queries, 4),
        tgt_ids_np, tgt_bbox_np, 1.0, 1.0, 1.0).reshape(bs, num_queries, -1)
    np.testing.assert_allclose(C, C_ref, rtol=2e-2, atol=2e-2)

    # sanity on the assignment structure
    for (i, j), sz in zip(indices, sizes):
        assert len(i) == len(j) == min(num_queries, sz)

    print("KERNEL_OK")
</pallas_src>

<mosaic_0001>
module attributes {stable_mosaic.version = 11 : i64} {
  func.func @_matcher_cost_kernel(%arg0: i32, %arg1: memref<8x32xf32, #tpu.memory_space<vmem>>, %arg2: memref<32x128xbf16, #tpu.memory_space<vmem>>, %arg3: memref<8x4xf32, #tpu.memory_space<vmem>>, %arg4: memref<4x128xf32, #tpu.memory_space<vmem>>, %arg5: memref<8x128xf32, #tpu.memory_space<vmem>>) attributes {dimension_semantics = [#tpu.dimension_semantics<parallel>], iteration_bounds = array<i64: 2>, scalar_prefetch = 0 : i64, scratch_operands = 0 : i64, tpu.core_type = #tpu.core_type<tc>, window_params = [{transform_indices = @transform_0, window_bounds = array<i64: 8, 32>}, {pipeline_mode = #tpu.pipeline_mode<synchronous>, transform_indices = @transform_1, window_bounds = array<i64: 32, 128>}, {transform_indices = @transform_2, window_bounds = array<i64: 8, 4>}, {pipeline_mode = #tpu.pipeline_mode<synchronous>, transform_indices = @transform_3, window_bounds = array<i64: 4, 128>}, {transform_indices = @transform_4, window_bounds = array<i64: 8, 128>}]} {
    %c0 = arith.constant 0 : index
    %c0_0 = arith.constant 0 : index
    %0 = vector.load %arg1[%c0, %c0_0] : memref<8x32xf32, #tpu.memory_space<vmem>>, vector<8x32xf32>
    %cst = arith.constant dense<0xFF800000> : vector<8xf32>
    %1 = vector.multi_reduction <maximumf>, %0, %cst [1] : vector<8x32xf32> to vector<8xf32>
    %2 = vector.shape_cast %1 : vector<8xf32> to vector<8x1xf32>
    %3 = vector.broadcast %2 : vector<8x1xf32> to vector<8x32xf32>
    %4 = arith.subf %0, %3 : vector<8x32xf32>
    %5 = math.exp %4 : vector<8x32xf32>
    %cst_1 = arith.constant dense<0.000000e+00> : vector<8xf32>
    %6 = vector.multi_reduction <add>, %5, %cst_1 [1] : vector<8x32xf32> to vector<8xf32>
    %7 = vector.shape_cast %6 : vector<8xf32> to vector<8x1xf32>
    %8 = tpu.reciprocal %7 {approx = true} : vector<8x1xf32> -> vector<8x1xf32>
    %cst_2 = arith.constant -1.000000e+00 : f32
    %9 = vector.broadcast %cst_2 : f32 to vector<8x1xf32>
    %10 = arith.mulf %9, %8 : vector<8x1xf32>
    %11 = vector.broadcast %10 : vector<8x1xf32> to vector<8x32xf32>
    %12 = arith.mulf %5, %11 : vector<8x32xf32>
    %13 = arith.truncf %12 : vector<8x32xf32> to vector<8x32xbf16>
    %c0_3 = arith.constant 0 : index
    %c0_4 = arith.constant 0 : index
    %14 = vector.load %arg2[%c0_3, %c0_4] : memref<32x128xbf16, #tpu.memory_space<vmem>>, vector<32x128xbf16>
    %cst_5 = arith.constant dense<0.000000e+00> : vector<8x128xf32>
    %15 = tpu.matmul %13, %14, %cst_5 {dimension_numbers = #tpu.dot_dimension_numbers<[1], [0], [0], [1], [0, 0, 1, 1], [], []>} : vector<8x32xbf16>, vector<32x128xbf16>, vector<8x128xf32> -> vector<8x128xf32>
    %c0_6 = arith.constant 0 : index
    %c0_7 = arith.constant 0 : index
    %16 = vector.load %arg3[%c0_6, %c0_7] : memref<8x4xf32, #tpu.memory_space<vmem>>, vector<8x4xf32>
    %c0_8 = arith.constant 0 : index
    %c0_9 = arith.constant 0 : index
    %17 = vector.load %arg4[%c0_8, %c0_9] : memref<4x128xf32, #tpu.memory_space<vmem>>, vector<4x128xf32>
    %cst_10 = arith.constant 1.000000e+00 : f32
    %18 = vector.broadcast %cst_10 : f32 to vector<8x4xf32>
    %19 = arith.mulf %16, %18 : vector<8x4xf32>
    %cst_11 = arith.constant 1.000000e+00 : f32
    %20 = vector.broadcast %cst_11 : f32 to vector<4x128xf32>
    %21 = arith.mulf %17, %20 : vector<4x128xf32>
    %22 = vector.extract_strided_slice %19 {offsets = [0, 0], sizes = [8, 1], strides = [1, 1]} : vector<8x4xf32> to vector<8x1xf32>
    %23 = vector.extract_strided_slice %21 {offsets = [0, 0], sizes = [1, 128], strides = [1, 1]} : vector<4x128xf32> to vector<1x128xf32>
    %24 = vector.broadcast %22 : vector<8x1xf32> to vector<8x128xf32>
    %25 = vector.broadcast %23 : vector<1x128xf32> to vector<8x128xf32>
    %26 = arith.subf %24, %25 : vector<8x128xf32>
    %27 = math.absf %26 : vector<8x128xf32>
    %28 = vector.extract_strided_slice %19 {offsets = [0, 1], sizes = [8, 1], strides = [1, 1]} : vector<8x4xf32> to vector<8x1xf32>
    %29 = vector.extract_strided_slice %21 {offsets = [1, 0], sizes = [1, 128], strides = [1, 1]} : vector<4x128xf32> to vector<1x128xf32>
    %30 = vector.broadcast %28 : vector<8x1xf32> to vector<8x128xf32>
    %31 = vector.broadcast %29 : vector<1x128xf32> to vector<8x128xf32>
    %32 = arith.subf %30, %31 : vector<8x128xf32>
    %33 = math.absf %32 : vector<8x128xf32>
    %34 = arith.addf %27, %33 : vector<8x128xf32>
    %35 = vector.extract_strided_slice %19 {offsets = [0, 2], sizes = [8, 1], strides = [1, 1]} : vector<8x4xf32> to vector<8x1xf32>
    %36 = vector.extract_strided_slice %21 {offsets = [2, 0], sizes = [1, 128], strides = [1, 1]} : vector<4x128xf32> to vector<1x128xf32>
    %37 = vector.broadcast %35 : vector<8x1xf32> to vector<8x128xf32>
    %38 = vector.broadcast %36 : vector<1x128xf32> to vector<8x128xf32>
    %39 = arith.subf %37, %38 : vector<8x128xf32>
    %40 = math.absf %39 : vector<8x128xf32>
    %41 = arith.addf %34, %40 : vector<8x128xf32>
    %42 = vector.extract_strided_slice %19 {offsets = [0, 3], sizes = [8, 1], strides = [1, 1]} : vector<8x4xf32> to vector<8x1xf32>
    %43 = vector.extract_strided_slice %21 {offsets = [3, 0], sizes = [1, 128], strides = [1, 1]} : vector<4x128xf32> to vector<1x128xf32>
    %44 = vector.broadcast %42 : vector<8x1xf32> to vector<8x128xf32>
    %45 = vector.broadcast %43 : vector<1x128xf32> to vector<8x128xf32>
    %46 = arith.subf %44, %45 : vector<8x128xf32>
    %47 = math.absf %46 : vector<8x128xf32>
    %48 = arith.addf %41, %47 : vector<8x128xf32>
    %49 = vector.extract_strided_slice %16 {offsets = [0, 0], sizes = [8, 1], strides = [1, 1]} : vector<8x4xf32> to vector<8x1xf32>
    %50 = vector.extract_strided_slice %16 {offsets = [0, 1], sizes = [8, 1], strides = [1, 1]} : vector<8x4xf32> to vector<8x1xf32>
    %51 = vector.extract_strided_slice %16 {offsets = [0, 2], sizes = [8, 1], strides = [1, 1]} : vector<8x4xf32> to vector<8x1xf32>
    %52 = vector.extract_strided_slice %16 {offsets = [0, 3], sizes = [8, 1], strides = [1, 1]} : vector<8x4xf32> to vector<8x1xf32>
    %53 = vector.extract_strided_slice %17 {offsets = [0, 0], sizes = [1, 128], strides = [1, 1]} : vector<4x128xf32> to vector<1x128xf32>
    %54 = vector.extract_strided_slice %17 {offsets = [1, 0], sizes = [1, 128], strides = [1, 1]} : vector<4x128xf32> to vector<1x128xf32>
    %55 = vector.extract_strided_slice %17 {offsets = [2, 0], sizes = [1, 128], strides = [1, 1]} : vector<4x128xf32> to vector<1x128xf32>
    %56 = vector.extract_strided_slice %17 {offsets = [3, 0], sizes = [1, 128], strides = [1, 1]} : vector<4x128xf32> to vector<1x128xf32>
    %cst_12 = arith.constant 5.000000e-01 : f32
    %57 = vector.broadcast %cst_12 : f32 to vector<8x1xf32>
    %58 = arith.mulf %57, %51 : vector<8x1xf32>
    %59 = arith.subf %49, %58 : vector<8x1xf32>
    %cst_13 = arith.constant 5.000000e-01 : f32
    %60 = vector.broadcast %cst_13 : f32 to vector<8x1xf32>
    %61 = arith.mulf %60, %52 : vector<8x1xf32>
    %62 = arith.subf %50, %61 : vector<8x1xf32>
    %cst_14 = arith.constant 5.000000e-01 : f32
    %63 = vector.broadcast %cst_14 : f32 to vector<8x1xf32>
    %64 = arith.mulf %63, %51 : vector<8x1xf32>
    %65 = arith.addf %49, %64 : vector<8x1xf32>
    %cst_15 = arith.constant 5.000000e-01 : f32
    %66 = vector.broadcast %cst_15 : f32 to vector<8x1xf32>
    %67 = arith.mulf %66, %52 : vector<8x1xf32>
    %68 = arith.addf %50, %67 : vector<8x1xf32>
    %cst_16 = arith.constant 5.000000e-01 : f32
    %69 = vector.broadcast %cst_16 : f32 to vector<1x128xf32>
    %70 = arith.mulf %69, %55 : vector<1x128xf32>
    %71 = arith.subf %53, %70 : vector<1x128xf32>
    %cst_17 = arith.constant 5.000000e-01 : f32
    %72 = vector.broadcast %cst_17 : f32 to vector<1x128xf32>
    %73 = arith.mulf %72, %56 : vector<1x128xf32>
    %74 = arith.subf %54, %73 : vector<1x128xf32>
    %cst_18 = arith.constant 5.000000e-01 : f32
    %75 = vector.broadcast %cst_18 : f32 to vector<1x128xf32>
    %76 = arith.mulf %75, %55 : vector<1x128xf32>
    %77 = arith.addf %53, %76 : vector<1x128xf32>
    %cst_19 = arith.constant 5.000000e-01 : f32
    %78 = vector.broadcast %cst_19 : f32 to vector<1x128xf32>
    %79 = arith.mulf %78, %56 : vector<1x128xf32>
    %80 = arith.addf %54, %79 : vector<1x128xf32>
    %81 = arith.subf %65, %59 : vector<8x1xf32>
    %82 = arith.subf %68, %62 : vector<8x1xf32>
    %83 = arith.mulf %81, %82 : vector<8x1xf32>
    %84 = arith.subf %77, %71 : vector<1x128xf32>
    %85 = arith.subf %80, %74 : vector<1x128xf32>
    %86 = arith.mulf %84, %85 : vector<1x128xf32>
    %87 = vector.broadcast %65 : vector<8x1xf32> to vector<8x128xf32>
    %88 = vector.broadcast %77 : vector<1x128xf32> to vector<8x128xf32>
    %89 = arith.minimumf %87, %88 : vector<8x128xf32>
    %90 = vector.broadcast %59 : vector<8x1xf32> to vector<8x128xf32>
    %91 = vector.broadcast %71 : vector<1x128xf32> to vector<8x128xf32>
    %92 = arith.maximumf %90, %91 : vector<8x128xf32>
    %93 = arith.subf %89, %92 : vector<8x128xf32>
    %cst_20 = arith.constant 0.000000e+00 : f32
    %94 = vector.broadcast %cst_20 : f32 to vector<8x128xf32>
    %95 = arith.maximumf %93, %94 : vector<8x128xf32>
    %96 = vector.broadcast %68 : vector<8x1xf32> to vector<8x128xf32>
    %97 = vector.broadcast %80 : vector<1x128xf32> to vector<8x128xf32>
    %98 = arith.minimumf %96, %97 : vector<8x128xf32>
    %99 = vector.broadcast %62 : vector<8x1xf32> to vector<8x128xf32>
    %100 = vector.broadcast %74 : vector<1x128xf32> to vector<8x128xf32>
    %101 = arith.maximumf %99, %100 : vector<8x128xf32>
    %102 = arith.subf %98, %101 : vector<8x128xf32>
    %cst_21 = arith.constant 0.000000e+00 : f32
    %103 = vector.broadcast %cst_21 : f32 to vector<8x128xf32>
    %104 = arith.maximumf %102, %103 : vector<8x128xf32>
    %105 = arith.mulf %95, %104 : vector<8x128xf32>
    %106 = vector.broadcast %83 : vector<8x1xf32> to vector<8x128xf32>
    %107 = vector.broadcast %86 : vector<1x128xf32> to vector<8x128xf32>
    %108 = arith.addf %106, %107 : vector<8x128xf32>
    %109 = arith.subf %108, %105 : vector<8x128xf32>
    %110 = tpu.reciprocal %109 {approx = true} : vector<8x128xf32> -> vector<8x128xf32>
    %111 = arith.mulf %105, %110 : vector<8x128xf32>
    %112 = vector.broadcast %65 : vector<8x1xf32> to vector<8x128xf32>
    %113 = vector.broadcast %77 : vector<1x128xf32> to vector<8x128xf32>
    %114 = arith.maximumf %112, %113 : vector<8x128xf32>
    %115 = vector.broadcast %59 : vector<8x1xf32> to vector<8x128xf32>
    %116 = vector.broadcast %71 : vector<1x128xf32> to vector<8x128xf32>
    %117 = arith.minimumf %115, %116 : vector<8x128xf32>
    %118 = arith.subf %114, %117 : vector<8x128xf32>
    %119 = vector.broadcast %68 : vector<8x1xf32> to vector<8x128xf32>
    %120 = vector.broadcast %80 : vector<1x128xf32> to vector<8x128xf32>
    %121 = arith.maximumf %119, %120 : vector<8x128xf32>
    %122 = vector.broadcast %62 : vector<8x1xf32> to vector<8x128xf32>
    %123 = vector.broadcast %74 : vector<1x128xf32> to vector<8x128xf32>
    %124 = arith.minimumf %122, %123 : vector<8x128xf32>
    %125 = arith.subf %121, %124 : vector<8x128xf32>
    %126 = arith.mulf %118, %125 : vector<8x128xf32>
    %cst_22 = arith.constant 1.000000e+00 : f32
    %127 = vector.broadcast %cst_22 : f32 to vector<8x128xf32>
    %128 = arith.subf %127, %111 : vector<8x128xf32>
    %129 = tpu.reciprocal %126 {approx = true} : vector<8x128xf32> -> vector<8x128xf32>
    %130 = arith.mulf %109, %129 : vector<8x128xf32>
    %131 = arith.subf %128, %130 : vector<8x128xf32>
    %132 = arith.addf %48, %15 : vector<8x128xf32>
    %cst_23 = arith.constant 1.000000e+00 : f32
    %133 = vector.broadcast %cst_23 : f32 to vector<8x128xf32>
    %134 = arith.mulf %133, %131 : vector<8x128xf32>
    %135 = arith.addf %132, %134 : vector<8x128xf32>
    %c0_24 = arith.constant 0 : index
    %c0_25 = arith.constant 0 : index
    %136 = vector.load %arg5[%c0_24, %c0_25] : memref<8x128xf32, #tpu.memory_space<vmem>>, vector<8x128xf32>
    tpu.vector_store %arg5[%c0_24, %c0_25], %135 {strides = array<i32>} : memref<8x128xf32, #tpu.memory_space<vmem>>, vector<8x128xf32>,
    return
  }
  func.func @transform_0(%arg0: i32) -> (i32, i32) {
    %c0_i32 = arith.constant 0 : i32
    %c0_i32_0 = arith.constant 0 : i32
    return %arg0, %c0_i32 : i32, i32
  }
  func.func @transform_1(%arg0: i32) -> (i32, i32) {
    %c0_i32 = arith.constant 0 : i32
    %c0_i32_0 = arith.constant 0 : i32
    %c0_i32_1 = arith.constant 0 : i32
    return %c0_i32, %c0_i32_0 : i32, i32
  }
  func.func @transform_2(%arg0: i32) -> (i32, i32) {
    %c0_i32 = arith.constant 0 : i32
    %c0_i32_0 = arith.constant 0 : i32
    return %arg0, %c0_i32 : i32, i32
  }
  func.func @transform_3(%arg0: i32) -> (i32, i32) {
    %c0_i32 = arith.constant 0 : i32
    %c0_i32_0 = arith.constant 0 : i32
    %c0_i32_1 = arith.constant 0 : i32
    return %c0_i32, %c0_i32_0 : i32, i32
  }
  func.func @transform_4(%arg0: i32) -> (i32, i32) {
    %c0_i32 = arith.constant 0 : i32
    %c0_i32_0 = arith.constant 0 : i32
    return %arg0, %c0_i32 : i32, i32
  }
}

</mosaic_0001>

<llo_original>
// kernel: tpu_custom_call.1
$region0: #{tpu_custom_call.1}
  #allocation0 [shape = 'u32[]', space=smem, size = 0x4, offset = 0x4, fixed_abs, tag = 'smem constant byte address 0x4 - core index']
  #allocation1 [shape = 'u32[144,128]{1,0:T(1,128)}', space=vmem, size = 0x12000, scoped, tag = 'internal scratch']
  %s0 = inlined_call_operand.vmem [shape: f32[16,32], index: 0, kind: input, shape index: {}]
  %s1 = inlined_call_operand.hbm [shape: bf16[32,128], index: 1, kind: input, shape index: {}]
  %s2 = inlined_call_operand.vmem [shape: f32[16,4], index: 2, kind: input, shape index: {}]
  %s3 = inlined_call_operand.vmem [shape: f32[4,128], index: 3, kind: input, shape index: {}]
  %s4 = inlined_call_operand.hbm [shape: f32[16,128], index: 4, kind: output, shape index: {}]
  %s5 = sld [smem:[#allocation0]]
  $region53: #{tpu_custom_call.1} parent=0
    _
  %s7 = ssub.s32 1, %s5
  %s8 = scalar_select 0, %s7, %s5
  $region1: #{tpu_custom_call.1} parent=0
    #allocation2 [shape = 'u8[8192]{0}', space=vmem, size = 0x2000, scoped, tag = 'input window, operand 1, single buffered']
    #allocation3 [shape = 's32[2]{0}', space=sflag, size = 0x8, scoped, tag = 'scoped memory for tpu_custom_call.1']
    #allocation4 [shape = 's32[2]{0}', space=sflag, size = 0x8, scoped, tag = 'scoped memory for tpu_custom_call.1']
    #allocation5 [shape = 'u8[8192]{0}', space=vmem, size = 0x2000, scoped, tag = 'output window, operand 0']
    %9 = vsyncpa [#allocation3], 0
    %10 = vsyncpa [#allocation4], 0
    %s11 = scalar_lea.sflag [#allocation4], 1
    %12 = vsyncpa %s11, 0
    loop: start=0, step=1, limit=4
    $region2: #{tpu_custom_call.1} parent=1 // loop_pre_header
      _
    $region3: #{tpu_custom_call.1} parent=1 // loop_header
      %s14 = sphi 0, %s18
      %p15 = scmp.ge.s32.totalorder %s14, 4
      %s24 = sphi 0, %s26
      %s27 = sphi 0, %s24
      %s28 = sphi 0, %s27
      %s44 = sphi 0, %s28
      %s48 = sphi 0, %s48
      %s50 = sphi 0, %s48
      %s51 = sphi 0, %s50
      %s65 = sphi 0, %s51
      %s71 = sphi 0, %s73
      %s74 = sphi 0, %s71
      %s75 = sphi 0, %s74
      %s91 = sphi 0, %s75
      %s95 = sphi 0, %s95
      %s97 = sphi 0, %s95
      %s98 = sphi 0, %s97
      %s112 = sphi 0, %s98
      %s118 = sphi 0, %s120
      %s121 = sphi 0, %s118
      %s122 = sphi 0, %s121
      %s138 = sphi 0, %s122
    $region4: #{tpu_custom_call.1} parent=1 // loop_header_branch
      %17 = sbr.rel (%p15) target = $region8
    $region5: #{tpu_custom_call.1} parent=1 // loop_body
      %s19 = ssub.s32 %s14, 1
      %s20 = ssub.s32 %s14, 2
      %s21 = sadd.s32 %s14, 1
      %s22 = ssub.s32 %s14, %s21
      %p23 = scmp.eq.s32.totalorder %s22, 0
      %s25 = sadd.s32 %s24, 1
      %s26 = scalar_select %p23, %s24, %s25
      %p29 = pneg %p23
      %p30 = scmp.eq.s32.totalorder %s14, 1
      %p31 = por %p29, %p30
      %p32 = scmp.ne.s32.totalorder %s24, %s27
      %p33 = scmp.eq.s32.totalorder %s14, 0
      %p34 = por %p32, %p33
      %p35 = scmp.ne.s32.totalorder %s24, %s27
      %p36 = scmp.eq.s32.totalorder %s19, 1
      %p37 = por %p35, %p36
      %p38 = scmp.ne.s32.totalorder %s27, %s28
      %p39 = scmp.eq.s32.totalorder %s19, 0
      %p40 = por %p38, %p39
      %p41 = scmp.ne.s32.totalorder %s27, %s28
      %p42 = scmp.eq.s32.totalorder %s20, 1
      %p43 = por %p41, %p42
      %p45 = scmp.ne.s32.totalorder %s28, %s44
      %p46 = scmp.eq.s32.totalorder %s20, 0
      %p47 = por %p45, %p46
      %s49 = sadd.s32 %s48, 1
      %p52 = scmp.eq.s32.totalorder %s14, 1
      %p53 = scmp.ne.s32.totalorder %s48, %s50
      %p54 = scmp.eq.s32.totalorder %s14, 0
      %p55 = por %p53, %p54
      %p56 = scmp.ne.s32.totalorder %s48, %s50
      %p57 = scmp.eq.s32.totalorder %s19, 1
      %p58 = por %p56, %p57
      %p59 = scmp.ne.s32.totalorder %s50, %s51
      %p60 = scmp.eq.s32.totalorder %s19, 0
      %p61 = por %p59, %p60
      %p62 = scmp.ne.s32.totalorder %s50, %s51
      %p63 = scmp.eq.s32.totalorder %s20, 1
      %p64 = por %p62, %p63
      %p66 = scmp.ne.s32.totalorder %s51, %s65
      %p67 = scmp.eq.s32.totalorder %s20, 0
      %p68 = por %p66, %p67
      %s69 = ssub.s32 %s14, %s21
      %p70 = scmp.eq.s32.totalorder %s69, 0
      %s72 = sadd.s32 %s71, 1
      %s73 = scalar_select %p70, %s71, %s72
      %p76 = pneg %p70
      %p77 = scmp.eq.s32.totalorder %s14, 1
      %p78 = por %p76, %p77
      %p79 = scmp.ne.s32.totalorder %s71, %s74
      %p80 = scmp.eq.s32.totalorder %s14, 0
      %p81 = por %p79, %p80
      %p82 = scmp.ne.s32.totalorder %s71, %s74
      %p83 = scmp.eq.s32.totalorder %s19, 1
      %p84 = por %p82, %p83
      %p85 = scmp.ne.s32.totalorder %s74, %s75
      %p86 = scmp.eq.s32.totalorder %s19, 0
      %p87 = por %p85, %p86
      %p88 = scmp.ne.s32.totalorder %s74, %s75
      %p89 = scmp.eq.s32.totalorder %s20, 1
      %p90 = por %p88, %p89
      %p92 = scmp.ne.s32.totalorder %s75, %s91
      %p93 = scmp.eq.s32.totalorder %s20, 0
      %p94 = por %p92, %p93
      %s96 = sadd.s32 %s95, 1
      %p99 = scmp.eq.s32.totalorder %s14, 1
      %p100 = scmp.ne.s32.totalorder %s95, %s97
      %p101 = scmp.eq.s32.totalorder %s14, 0
      %p102 = por %p100, %p101
      %p103 = scmp.ne.s32.totalorder %s95, %s97
      %p104 = scmp.eq.s32.totalorder %s19, 1
      %p105 = por %p103, %p104
      %p106 = scmp.ne.s32.totalorder %s97, %s98
      %p107 = scmp.eq.s32.totalorder %s19, 0
      %p108 = por %p106, %p107
      %p109 = scmp.ne.s32.totalorder %s97, %s98
      %p110 = scmp.eq.s32.totalorder %s20, 1
      %p111 = por %p109, %p110
      %p113 = scmp.ne.s32.totalorder %s98, %s112
      %p114 = scmp.eq.s32.totalorder %s20, 0
      %p115 = por %p113, %p114
      %s116 = ssub.s32 %s14, %s21
      %p117 = scmp.eq.s32.totalorder %s116, 0
      %s119 = sadd.s32 %s118, 1
      %s120 = scalar_select %p117, %s118, %s119
      %p123 = pneg %p117
      %p124 = scmp.eq.s32.totalorder %s14, 1
      %p125 = por %p123, %p124
      %p126 = scmp.ne.s32.totalorder %s118, %s121
      %p127 = scmp.eq.s32.totalorder %s14, 0
      %p128 = por %p126, %p127
      %p129 = scmp.ne.s32.totalorder %s118, %s121
      %p130 = scmp.eq.s32.totalorder %s19, 1
      %p131 = por %p129, %p130
      %p132 = scmp.ne.s32.totalorder %s121, %s122
      %p133 = scmp.eq.s32.totalorder %s19, 0
      %p134 = por %p132, %p133
      %p135 = scmp.ne.s32.totalorder %s121, %s122
      %p136 = scmp.eq.s32.totalorder %s20, 1
      %p137 = por %p135, %p136
      %p139 = scmp.ne.s32.totalorder %s122, %s138
      %p140 = scmp.eq.s32.totalorder %s20, 0
      %p141 = por %p139, %p140
      %p142 = scmp.le.s32.totalorder 1, %s14
      %p143 = scmp.lt.s32.totalorder %s14, 3
      %p144 = pnand %p142, %p143
      %p145 = pneg %p144
      // Predicated region
      $region9: #{tpu_custom_call.1} parent=5 // pred_check
        _
      $region10: #{tpu_custom_call.1} parent=5 // pred_check_branch
        %147 = sbr.rel (%p144) target = $region12
      $region11: #{tpu_custom_call.1} parent=5 // pred_region
        %s148 = ssub.s32 %s14, 1
        // Predicated region
        $region13: #{tpu_custom_call.1} parent=11 // pred_check
          %p149 = pneg %p61
        $region14: #{tpu_custom_call.1} parent=11 // pred_check_branch
          %151 = sbr.rel (%p149) target = $region16
        $region15: #{tpu_custom_call.1} parent=11 // pred_region
          %s153 = ssub.s32 256, 256
          %154 = vsyncadd [#allocation3], %s153
          %s155 = sshll.u32 [#allocation2], 4
          %s156 = int_to_ptr.vmem [resolvable:$true] %s155
          %161 = dma.hbm_to_vmem [thread:$0]  %s1, 256, %s156, [#allocation3], 64, 64, 4
        $region16: #{tpu_custom_call.1} parent=11 // pred_fallthru
          _
        // Predicated region
        $region17: #{tpu_custom_call.1} parent=11 // pred_check
          %p162 = pneg %p108
        $region18: #{tpu_custom_call.1} parent=11 // pred_check_branch
          %164 = sbr.rel (%p162) target = $region20
        $region19: #{tpu_custom_call.1} parent=11 // pred_region
          _
        $region20: #{tpu_custom_call.1} parent=11 // pred_fallthru
          _
      $region12: #{tpu_custom_call.1} parent=5 // pred_fallthru
        _
      %p165 = scmp.lt.s32.totalorder %s14, 2
      // Predicated region
      $region21: #{tpu_custom_call.1} parent=5 // pred_check
        %p166 = pneg %p165
      $region22: #{tpu_custom_call.1} parent=5 // pred_check_branch
        %168 = sbr.rel (%p166) target = $region24
      $region23: #{tpu_custom_call.1} parent=5 // pred_region
        // Predicated region
        $region25: #{tpu_custom_call.1} parent=23 // pred_check
          %p169 = pneg %p34
        $region26: #{tpu_custom_call.1} parent=23 // pred_check_branch
          %171 = sbr.rel (%p169) target = $region28
        $region27: #{tpu_custom_call.1} parent=23 // pred_region
          %p172 = scmp.lt.s32.totalorder %s14, 1
          %s173 = scalar_select %p172, %s14, 1
          %s174 = smul.addr %s173, 8
          %s175 = scalar_lea.vmem %s0, %s174
        $region28: #{tpu_custom_call.1} parent=23 // pred_fallthru
          _
        // Predicated region
        $region29: #{tpu_custom_call.1} parent=23 // pred_check
          %p176 = pneg %p81
        $region30: #{tpu_custom_call.1} parent=23 // pred_check_branch
          %178 = sbr.rel (%p176) target = $region32
        $region31: #{tpu_custom_call.1} parent=23 // pred_region
          %p179 = scmp.lt.s32.totalorder %s14, 1
          %s180 = scalar_select %p179, %s14, 1
          %s181 = smul.addr %s180, 8
          %s182 = scalar_lea.vmem %s2, %s181
        $region32: #{tpu_custom_call.1} parent=23 // pred_fallthru
          _
      $region24: #{tpu_custom_call.1} parent=5 // pred_fallthru
        _
      %p183 = scmp.le.s32.totalorder 1, %s14
      %p184 = scmp.lt.s32.totalorder %s14, 3
      %p185 = pnand %p183, %p184
      %p186 = pneg %p185
      // Predicated region
      $region33: #{tpu_custom_call.1} parent=5 // pred_check
        _
      $region34: #{tpu_custom_call.1} parent=5 // pred_check_branch
        %188 = sbr.rel (%p185) target = $region36
      $region35: #{tpu_custom_call.1} parent=5 // pred_region
        %s189 = ssub.s32 %s14, 1
        // Predicated region
        $region37: #{tpu_custom_call.1} parent=35 // pred_check
          %p190 = pneg %p61
        $region38: #{tpu_custom_call.1} parent=35 // pred_check_branch
          %192 = sbr.rel (%p190) target = $region40
        $region39: #{tpu_custom_call.1} parent=35 // pred_region
          %193 = dma.done [#allocation3], 256
        $region40: #{tpu_custom_call.1} parent=35 // pred_fallthru
          _
        %p194 = scmp.lt.s32.totalorder %s19, 1
        %s195 = scalar_select %p194, %s19, 1
        %s196 = smul.addr %s195, 8
        %s197 = scalar_lea.vmem %s0, %s196
        %p198 = pneg %p40
        %p199 = pneg %p37
        %p200 = pneg %p61
        %p201 = pneg %p58
        %p202 = scmp.lt.s32.totalorder %s19, 1
        %s203 = scalar_select %p202, %s19, 1
        %s204 = smul.addr %s203, 8
        %s205 = scalar_lea.vmem %s2, %s204
        %p206 = pneg %p87
        %p207 = pneg %p84
        %p208 = pneg %p108
        %p209 = pneg %p105
        %p210 = pneg %p134
        %p211 = pneg %p131
        %s212 = sand.u32 %s121, 1
        %s213 = scalar_lea.sflag [#allocation4], %s212
        %s214 = sand.u32 %s121, 1
        %s215 = smul.addr %s214, 8
        %s216 = scalar_lea.vmem [#allocation5], %s215
        %p217 = scmp.lt.s32.totalorder %s19, 1
        %s218 = scalar_select %p217, %s19, 1
        %s219 = smul.addr %s218, 8
        %s220 = scalar_lea.vmem %s0, %s219
        %p221 = scmp.lt.s32.totalorder %s19, 1
        %s222 = scalar_select %p221, %s19, 1
        %s223 = smul.addr %s222, 8
        %s224 = scalar_lea.vmem %s2, %s223
        %v226 = vld [vmem:[%s220] sm:$0xff]
        %vm227 = vcmask 261120
        %v228 = vsel %vm227, %v226, -inf
        %229 = vmax.xlane.f32.xlu0 %v228
        %v230 = vpop.xlane.xlu0 %229
        %v231 = vsub.f32 %v226, %v230
        %v232 = vmul.f32 %v231, 1.442695
        %v233 = vpow.pop %v232
        %v234 = vsel %vm227, %v233, 0.0
        %235 = vadd.xlane.f32.xlu0 %v234
        %v236 = vpop.xlane.xlu0 %235
        %v237 = vrcp.pop %v236
        %v238 = vmul.f32 %v237, -1.0
        %v239 = vmul.f32 %v233, %v238
        %v240 = vpack.c.bf16 %v239, %v239
        %v241 = vld [vmem:[#allocation2] sm:$0xf]
        %v242 = vld [vmem:[#allocation2 + $0x4] sm:$0xf]
        %v243 = vld [vmem:[#allocation2 + $0x8] sm:$0xf]
        %v244 = vld [vmem:[#allocation2 + $0xc] sm:$0xf]
        %v249 = vunpack.c.l.b16 %v241
        %v250 = vunpack.c.l.b16 %v242
        %v251 = vunpack.c.l.b16 %v243
        %v252 = vunpack.c.l.b16 %v244
        %v253 = vpack.c.b16 %v250, %v249
        %v254 = vpack.c.b16 %v252, %v251
        %v258 = vsel %vm227, %v240, 0
        %260 = vmatprep.subr.bf16.mxu0 0
        %261 = vmatpush1.bf16.msra.mxu0 %v253
        %262 = vmatprep.subr.bf16.mxu0 0
        %263 = vmatpush1.bf16.msra.mxu0 %v254
        %264 = vmatprep.subr.bf16.mxu0 0
        %265 = vmatpush1.bf16.msra.mxu0 0
        %266 = vmatprep.subr.bf16.mxu0 0
        %267 = vmatpush1.bf16.msra.mxu0 0
        %268 = vmatprep.subr.bf16.mxu0 0
        %269 = vmatpush1.bf16.msra.mxu0 0
        %270 = vmatprep.subr.bf16.mxu0 0
        %271 = vmatpush1.bf16.msra.mxu0 0
        %272 = vmatprep.subr.bf16.mxu0 0
        %273 = vmatpush1.bf16.msra.mxu0 0
        %274 = vmatprep.subr.bf16.mxu0 0
        %275 = vmatpush1.bf16.msra.mxu0 0
        %276 = vmatprep.subr.bf16.mxu0 0
        %277 = vmatpush1.bf16.msra.mxu0 0
        %278 = vmatprep.subr.bf16.mxu0 0
        %279 = vmatpush1.bf16.msra.mxu0 0
        %280 = vmatprep.subr.bf16.mxu0 0
        %281 = vmatpush1.bf16.msra.mxu0 0
        %282 = vmatprep.subr.bf16.mxu0 0
        %283 = vmatpush1.bf16.msra.mxu0 0
        %284 = vmatprep.subr.bf16.mxu0 0
        %285 = vmatpush1.bf16.msra.mxu0 0
        %286 = vmatprep.subr.bf16.mxu0 0
        %287 = vmatpush1.bf16.msra.mxu0 0
        %288 = vmatprep.subr.bf16.mxu0 0
        %289 = vmatpush1.bf16.msra.mxu0 0
        %290 = vmatprep.subr.bf16.mxu0 0
        %291 = vmatpush1.bf16.msra.mxu0 0
        %292 = vmatprep.mubr.bf16.mxu0 0
        %293 = vmatmul.mubr.bf16.gmra.mrb[0].mxu0 %v258
        %v294 = vpop.f32.mrb[0].mxu0
        %v295 = vadd.f32 0.0, %v294
        %v296 = vpop.f32.mrb[0].mxu0
        %v297 = vpop.f32.mrb[0].mxu0
        %v298 = vpop.f32.mrb[0].mxu0
        %299 = vdwg.mxu0
        %v300 = vld [vmem:[%s224] sm:$0xff]
        %v301 = vld [vmem:[%s3] sm:$0xf]
        %303 = vset.pattern.permute.xlu0 0
        %304 = vperm.xlu0 %303, %v300
        %v305 = vpop.permute.xlu0 %304
        %v307 = vlaneseq
        %v308 = vshrl.u32 %v307, 7
        %v309 = vsub.s32 0, %v308
        %v310 = vrot.slane %v301, %v309
        %v311 = vsub.f32 %v305, %v310
        %v312 = vand.u32 2147483647, %v311
        %313 = vset.pattern.permute.xlu0 1
        %314 = vperm.xlu0 %313, %v300
        %v315 = vpop.permute.xlu0 %314
        %v317 = vlaneseq
        %v318 = vshrl.u32 %v317, 7
        %v319 = vsub.s32 1, %v318
        %v320 = vrot.slane %v301, %v319
        %v321 = vsub.f32 %v315, %v320
        %v322 = vand.u32 2147483647, %v321
        %v323 = vadd.f32 %v312, %v322
        %324 = vset.pattern.permute.xlu0 2
        %325 = vperm.xlu0 %324, %v300
        %v326 = vpop.permute.xlu0 %325
        %v328 = vlaneseq
        %v329 = vshrl.u32 %v328, 7
        %v330 = vsub.s32 2, %v329
        %v331 = vrot.slane %v301, %v330
        %v332 = vsub.f32 %v326, %v331
        %v333 = vand.u32 2147483647, %v332
        %v334 = vadd.f32 %v323, %v333
        %335 = vset.pattern.permute.xlu0 3
        %336 = vperm.xlu0 %335, %v300
        %v337 = vpop.permute.xlu0 %336
        %v339 = vlaneseq
        %v340 = vshrl.u32 %v339, 7
        %v341 = vsub.s32 3, %v340
        %v342 = vrot.slane %v301, %v341
        %v343 = vsub.f32 %v337, %v342
        %v344 = vand.u32 2147483647, %v343
        %v345 = vadd.f32 %v334, %v344
        %v346 = vmul.f32 %v300, 0.5
        %348 = vrot.lane.b32.xlu0 %v346, 126
        %v349 = vpop.permute.xlu0 %348
        %v351 = vsub.f32 %v300, %v349
        %v352 = vadd.f32 %v300, %v349
        %v353 = vmul.f32 %v301, 0.5
        %v355 = vrot.slane %v353, 2
        %v357 = vsub.f32 %v301, %v355
        %v358 = vadd.f32 %v301, %v355
        %v359 = vsub.f32 %v352, %v351
        %361 = vrot.lane.b32.xlu0 %v359, 127
        %v362 = vpop.permute.xlu0 %361
        %v364 = vmul.f32 %v359, %v362
        %v365 = vsub.f32 %v358, %v357
        %v367 = vrot.slane %v365, 1
        %v369 = vmul.f32 %v365, %v367
        %371 = vset.pattern.permute.xlu0 0
        %372 = vperm.xlu0 %371, %v352
        %v373 = vpop.permute.xlu0 %372
        %v375 = vlaneseq
        %v376 = vshrl.u32 %v375, 7
        %v377 = vsub.s32 0, %v376
        %v378 = vrot.slane %v358, %v377
        %v379 = vmin.f32 %v373, %v378
        %381 = vset.pattern.permute.xlu0 0
        %382 = vperm.xlu0 %381, %v351
        %v383 = vpop.permute.xlu0 %382
        %v385 = vlaneseq
        %v386 = vshrl.u32 %v385, 7
        %v387 = vsub.s32 0, %v386
        %v388 = vrot.slane %v357, %v387
        %v389 = vmax.f32 %v383, %v388
        %v390 = vsub.f32 %v379, %v389
        %v391 = vmax.f32 %v390, 0.0
        %392 = vset.pattern.permute.xlu0 1
        %393 = vperm.xlu0 %392, %v352
        %v394 = vpop.permute.xlu0 %393
        %v396 = vlaneseq
        %v397 = vshrl.u32 %v396, 7
        %v398 = vsub.s32 1, %v397
        %v399 = vrot.slane %v358, %v398
        %v400 = vmin.f32 %v394, %v399
        %401 = vset.pattern.permute.xlu0 1
        %402 = vperm.xlu0 %401, %v351
        %v403 = vpop.permute.xlu0 %402
        %v405 = vlaneseq
        %v406 = vshrl.u32 %v405, 7
        %v407 = vsub.s32 1, %v406
        %v408 = vrot.slane %v357, %v407
        %v409 = vmax.f32 %v403, %v408
        %v410 = vsub.f32 %v400, %v409
        %v411 = vmax.f32 %v410, 0.0
        %v412 = vmul.f32 %v391, %v411
        %414 = vset.pattern.permute.xlu0 0
        %415 = vperm.xlu0 %414, %v364
        %v416 = vpop.permute.xlu0 %415
        %v418 = vlaneseq
        %v419 = vshrl.u32 %v418, 7
        %v420 = vsub.s32 0, %v419
        %v421 = vrot.slane %v369, %v420
        %v422 = vadd.f32 %v416, %v421
        %v423 = vsub.f32 %v422, %v412
        %v424 = vrcp.pop %v423
        %v425 = vmul.f32 %v412, %v424
        %v426 = vmax.f32 %v373, %v378
        %v427 = vmin.f32 %v383, %v388
        %v428 = vsub.f32 %v426, %v427
        %v429 = vmax.f32 %v394, %v399
        %v430 = vmin.f32 %v403, %v408
        %v431 = vsub.f32 %v429, %v430
        %v432 = vmul.f32 %v428, %v431
        %v433 = vsub.f32 1.0, %v425
        %v434 = vrcp.pop %v432
        %v435 = vmul.f32 %v423, %v434
        %v436 = vsub.f32 %v433, %v435
        %v437 = vadd.f32 %v345, %v295
        %v438 = vadd.f32 %v437, %v436
        %439 = vst [vmem:[%s216] sm:$0xff] %v438
        %s440 = sand.u32 %s121, 1
        %s441 = scalar_lea.sflag [#allocation4], %s440
        %s442 = sand.u32 %s121, 1
        %s443 = smul.addr %s442, 8
        %s444 = scalar_lea.vmem [#allocation5], %s443
        // Predicated region
        $region41: #{tpu_custom_call.1} parent=35 // pred_check
          %p445 = pneg %p131
        $region42: #{tpu_custom_call.1} parent=35 // pred_check_branch
          %447 = sbr.rel (%p445) target = $region44
        $region43: #{tpu_custom_call.1} parent=35 // pred_region
          %s449 = ssub.s32 128, 128
          %450 = vsyncadd %s441, %s449
          %s451 = smul.addr %s19, 128
          %s452 = scalar_lea.hbm %s4, %s451
          %s454 = sshll.u32 %s444, 4
          %s455 = int_to_ptr.vmem [resolvable:$true] %s454
          %457 = dma.vmem_to_hbm [thread:$0]  %s455, 128, %s452, %s441
        $region44: #{tpu_custom_call.1} parent=35 // pred_fallthru
          _
      $region36: #{tpu_custom_call.1} parent=5 // pred_fallthru
        _
      %p458 = scmp.le.s32.totalorder 2, %s14
      // Predicated region
      $region45: #{tpu_custom_call.1} parent=5 // pred_check
        %p459 = pneg %p458
      $region46: #{tpu_custom_call.1} parent=5 // pred_check_branch
        %461 = sbr.rel (%p459) target = $region48
      $region47: #{tpu_custom_call.1} parent=5 // pred_region
        %s462 = ssub.s32 %s14, 2
        // Predicated region
        $region49: #{tpu_custom_call.1} parent=47 // pred_check
          %p463 = pneg %p137
        $region50: #{tpu_custom_call.1} parent=47 // pred_check_branch
          %465 = sbr.rel (%p463) target = $region52
        $region51: #{tpu_custom_call.1} parent=47 // pred_region
          %s466 = sand.u32 %s122, 1
          %s467 = scalar_lea.sflag [#allocation4], %s466
          %s468 = sand.u32 %s122, 1
          %s469 = smul.addr %s468, 8
          %s470 = scalar_lea.vmem [#allocation5], %s469
          %471 = dma.done %s467, 128
        $region52: #{tpu_custom_call.1} parent=47 // pred_fallthru
          _
      $region48: #{tpu_custom_call.1} parent=5 // pred_fallthru
        _
    $region6: #{tpu_custom_call.1} parent=1 // loop_footer
      %s18 = sadd.s32 1, %s14
    $region7: #{tpu_custom_call.1} parent=1 // loop_footer_branch
      %13 = sbr.rel target = $region3
    $region8: #{tpu_custom_call.1} parent=1 // loop_exit
      _
    %472 = vsyncpa [#allocation3], 1
    %s473 = scalar_lea.sflag [#allocation3], 1
    %474 = vsyncpa %s473, 1
    %475 = vsyncpa [#allocation4], 1
    %s476 = scalar_lea.sflag [#allocation4], 1
    %477 = vsyncpa %s476, 1

</llo_original>
